<compile_context>
chip_gen: v7x
topology: tpu7x:2x2x1
jax: 0.10.0
libtpu: 0.0.40
codegen_flags: <defaults>
</compile_context>

<pallas_src>
import math

import jax
import jax.numpy as jnp
from jax.experimental import pallas as pl
from jax.experimental.pallas import tpu as pltpu


_VMEM_LIMIT = 48 * 1024 * 1024  # below v7x's 64 MiB physical VMEM, with headroom


def _round_up(x, m):
    return ((x + m - 1) // m) * m


def _tile(dim, target):
    """Pick (tile, padded_dim): full dim if it fits one tile, else `target`."""
    if dim <= target:
        return dim, dim
    return target, _round_up(dim, target)


def _pad_to(a, shape):
    pads = [(0, s - d) for d, s in zip(a.shape, shape)]
    if all(p == (0, 0) for p in pads):
        return a
    return jnp.pad(a, pads)


# ---------------------------------------------------------------------------
# Stage 1: support = X2 @ W   (X2 = x reshaped/padded to (B*N, Fin), W shared)
# grid = (M tiles, Fout tiles, K tiles)  -- reduction innermost
# ---------------------------------------------------------------------------
def _matmul_kernel(x_ref, w_ref, o_ref, acc_ref):
    k = pl.program_id(2)

    @pl.when(k == 0)
    def _():
        acc_ref[...] = jnp.zeros_like(acc_ref)

    acc_ref[...] += jnp.dot(x_ref[...], w_ref[...],
                            preferred_element_type=jnp.float32)

    @pl.when(k == pl.num_programs(2) - 1)
    def _():
        o_ref[...] = acc_ref[...].astype(o_ref.dtype)


# ---------------------------------------------------------------------------
# Stage 2: out = adj @ support (+ bias)
# grid = (B, row tiles, Fout tiles, K tiles)  -- reduction innermost
# ---------------------------------------------------------------------------
def _aggregate_kernel(adj_ref, sup_ref, o_ref, acc_ref):
    k = pl.program_id(3)

    @pl.when(k == 0)
    def _():
        acc_ref[...] = jnp.zeros_like(acc_ref)

    acc_ref[...] += jnp.dot(adj_ref[0], sup_ref[0],
                            preferred_element_type=jnp.float32)

    @pl.when(k == pl.num_programs(3) - 1)
    def _():
        o_ref[0] = acc_ref[...].astype(o_ref.dtype)


def _aggregate_bias_kernel(adj_ref, sup_ref, b_ref, o_ref, acc_ref):
    k = pl.program_id(3)

    @pl.when(k == 0)
    def _():
        acc_ref[...] = jnp.zeros_like(acc_ref)

    acc_ref[...] += jnp.dot(adj_ref[0], sup_ref[0],
                            preferred_element_type=jnp.float32)

    @pl.when(k == pl.num_programs(3) - 1)
    def _():
        # Bias added exactly once, at the final reduction step, in f32.
        o_ref[0] = (acc_ref[...] + b_ref[0]).astype(o_ref.dtype)


def graph_convolution(x, adj, weight, bias=None, *,
                      compute_dtype=jnp.bfloat16,
                      tile_m=512, tile_n=512, tile_k=256):
    """Pallas GCN forward.

    x      : (B, N, Fin)   float32
    adj    : (B, N, N)     float32
    weight : (Fin, Fout)   float32
    bias   : (1, 1, Fout)  float32 or None
    returns: (B, N, Fout)  x.dtype

    compute_dtype: dtype fed to the MXU (accumulation is always f32).
    tile_m / tile_n / tile_k: row / output-column / contraction tiles.
    """
    B, N, Fin = x.shape
    Fin_w, Fout = weight.shape
    assert Fin_w == Fin, "weight shape mismatch"
    out_dtype = x.dtype
    cdt = compute_dtype

    # Tile / padding derivation (blocks must be (8,128)-aligned or full-dim).
    tm, Nm_pad = _tile(N, tile_m)                  # adj rows / output rows
    tk, Nk_pad = _tile(N, tile_k)                  # adj cols (reduction)
    tkf, Fin_pad = _tile(Fin, tile_k)              # x @ W contraction
    tn, Fout_pad = _tile(_round_up(Fout, 128), tile_n)   # lane-dense output cols

    # ---------------- Stage 1: support = x @ W (one big shared matmul) ----------
    Ms = B * Nk_pad
    tms, Ms_pad = _tile(Ms, tile_m)

    x2 = _pad_to(x.astype(cdt), (B, Nk_pad, Fin_pad)).reshape(B * Nk_pad, Fin_pad)
    x2 = _pad_to(x2, (Ms_pad, Fin_pad))
    w2 = _pad_to(weight.astype(cdt), (Fin_pad, Fout_pad))

    support = pl.pallas_call(
        _matmul_kernel,
        out_shape=jax.ShapeDtypeStruct((Ms_pad, Fout_pad), cdt),
        grid_spec=pltpu.PrefetchScalarGridSpec(
            num_scalar_prefetch=0,
            grid=(Ms_pad // tms, Fout_pad // tn, Fin_pad // tkf),
            in_specs=[
                pl.BlockSpec((tms, tkf), lambda i, j, k: (i, k)),
                pl.BlockSpec((tkf, tn), lambda i, j, k: (k, j)),
            ],
            out_specs=pl.BlockSpec((tms, tn), lambda i, j, k: (i, j)),
            scratch_shapes=[pltpu.VMEM((tms, tn), jnp.float32)],
        ),
        compiler_params=pltpu.CompilerParams(
            dimension_semantics=("parallel", "parallel", "arbitrary"),
            vmem_limit_bytes=_VMEM_LIMIT),
    )(x2, w2)
    support = support[:B * Nk_pad].reshape(B, Nk_pad, Fout_pad)

    # ---------------- Stage 2: out = adj @ support (+ bias), tiled --------------
    adj_p = _pad_to(adj.astype(cdt), (B, Nm_pad, Nk_pad))

    in_specs = [
        pl.BlockSpec((1, tm, tk), lambda b, i, j, k: (b, i, k)),   # adj tile
        pl.BlockSpec((1, tk, tn), lambda b, i, j, k: (b, k, j)),   # support tile
    ]
    args = [adj_p, support]
    kernel = _aggregate_kernel
    if bias is not None:
        bias_p = _pad_to(bias.astype(jnp.float32), (1, 1, Fout_pad))
        in_specs.append(pl.BlockSpec((1, 1, tn), lambda b, i, j, k: (0, 0, j)))
        args.append(bias_p)
        kernel = _aggregate_bias_kernel

    out = pl.pallas_call(
        kernel,
        out_shape=jax.ShapeDtypeStruct((B, Nm_pad, Fout_pad), out_dtype),
        grid_spec=pltpu.PrefetchScalarGridSpec(
            num_scalar_prefetch=0,
            grid=(B, Nm_pad // tm, Fout_pad // tn, Nk_pad // tk),
            in_specs=in_specs,
            out_specs=pl.BlockSpec((1, tm, tn), lambda b, i, j, k: (b, i, j)),
            scratch_shapes=[pltpu.VMEM((tm, tn), jnp.float32)],
        ),
        compiler_params=pltpu.CompilerParams(
            dimension_semantics=("parallel", "parallel", "parallel", "arbitrary"),
            vmem_limit_bytes=_VMEM_LIMIT),
    )(*args)

    return out[:, :N, :Fout]


def init_gcn_params(key, in_features, out_features, bias=False):
    """Deterministic init matching GraphConvolution.reset_parameters."""
    stdv = 1.0 / math.sqrt(out_features)
    kw, kb = jax.random.split(key)
    weight = jax.random.uniform(
        kw, (in_features, out_features), jnp.float32, minval=-stdv, maxval=stdv)
    b = None
    if bias:
        b = jax.random.uniform(
            kb, (1, 1, out_features), jnp.float32, minval=-stdv, maxval=stdv)
    return weight, b


if __name__ == "__main__":
    key = jax.random.PRNGKey(0)
    k_x, k_adj, k_param = jax.random.split(key, 3)

    B, N, Fin, Fout = 2, 16, 32, 64
    x = jax.random.normal(k_x, (B, N, Fin), jnp.float32)
    adj = jax.random.normal(k_adj, (B, N, N), jnp.float32)

    weight_nb, _ = init_gcn_params(k_param, Fin, Fout, bias=False)
    weight_b, bias_b = init_gcn_params(k_param, Fin, Fout, bias=True)

    # --- exact-semantics path (f32 operands) vs f32 reference -------------------
    out_f32_nb = graph_convolution(x, adj, weight_nb, compute_dtype=jnp.float32)
    out_f32_b = graph_convolution(x, adj, weight_b, bias_b,
                                  compute_dtype=jnp.float32)
    jax.block_until_ready((out_f32_nb, out_f32_b))

    ref_nb = jnp.einsum("bnm,bmf->bnf", adj, x @ weight_nb)
    ref_b = jnp.einsum("bnm,bmf->bnf", adj, x @ weight_b) + bias_b
    assert out_f32_nb.shape == (B, N, Fout)
    assert out_f32_b.shape == (B, N, Fout)
    assert jnp.allclose(out_f32_nb, ref_nb, atol=1e-4, rtol=1e-4)
    assert jnp.allclose(out_f32_b, ref_b, atol=1e-4, rtol=1e-4)

    # --- fast path (default bf16 operands, f32 accumulation) --------------------
    out_bf_b = graph_convolution(x, adj, weight_b, bias_b)
    jax.block_until_ready(out_bf_b)

    def _bf(a):
        return a.astype(jnp.bfloat16).astype(jnp.float32)

    sup_bf = (_bf(x) @ _bf(weight_b)).astype(jnp.bfloat16).astype(jnp.float32)
    ref_bf = jnp.einsum("bnm,bmf->bnf", _bf(adj), sup_bf) + bias_b
    assert out_bf_b.shape == (B, N, Fout)
    assert jnp.allclose(out_bf_b, ref_bf, atol=2e-2, rtol=2e-2)

    print("KERNEL_OK")
</pallas_src>

<mosaic_0001>
module attributes {stable_mosaic.version = 11 : i64} {
  func.func @_matmul_kernel(%arg0: i32, %arg1: i32, %arg2: i32, %arg3: memref<32x32xf32, #tpu.memory_space<vmem>>, %arg4: memref<32x128xf32, #tpu.memory_space<vmem>>, %arg5: memref<32x128xf32, #tpu.memory_space<vmem>>, %arg6: memref<32x128xf32, #tpu.memory_space<vmem>>) attributes {dimension_semantics = [#tpu.dimension_semantics<parallel>, #tpu.dimension_semantics<parallel>, #tpu.dimension_semantics<arbitrary>], iteration_bounds = array<i64: 1, 1, 1>, scalar_prefetch = 0 : i64, scratch_operands = 1 : i64, tpu.core_type = #tpu.core_type<tc>, window_params = [{transform_indices = @transform_0, window_bounds = array<i64: 32, 32>}, {transform_indices = @transform_1, window_bounds = array<i64: 32, 128>}, {transform_indices = @transform_2, window_bounds = array<i64: 32, 128>}]} {
    %c0_i32 = arith.constant 0 : i32
    %0 = arith.cmpi eq, %arg2, %c0_i32 : i32
    %1 = arith.extui %0 : i1 to i32
    %c0_i32_0 = arith.constant 0 : i32
    %2 = arith.cmpi ne, %1, %c0_i32_0 : i32
    scf.if %2 {
      %cst_10 = arith.constant 0.000000e+00 : f32
      %12 = vector.broadcast %cst_10 : f32 to vector<32x128xf32>
      %c0_11 = arith.constant 0 : index
      %c0_12 = arith.constant 0 : index
      %13 = vector.load %arg6[%c0_11, %c0_12] : memref<32x128xf32, #tpu.memory_space<vmem>>, vector<32x128xf32>
      tpu.vector_store %arg6[%c0_11, %c0_12], %12 {strides = array<i32>} : memref<32x128xf32, #tpu.memory_space<vmem>>, vector<32x128xf32>,
    } else {
    }
    %c0 = arith.constant 0 : index
    %c0_1 = arith.constant 0 : index
    %3 = vector.load %arg6[%c0, %c0_1] : memref<32x128xf32, #tpu.memory_space<vmem>>, vector<32x128xf32>
    %c0_2 = arith.constant 0 : index
    %c0_3 = arith.constant 0 : index
    %4 = vector.load %arg3[%c0_2, %c0_3] : memref<32x32xf32, #tpu.memory_space<vmem>>, vector<32x32xf32>
    %c0_4 = arith.constant 0 : index
    %c0_5 = arith.constant 0 : index
    %5 = vector.load %arg4[%c0_4, %c0_5] : memref<32x128xf32, #tpu.memory_space<vmem>>, vector<32x128xf32>
    %cst = arith.constant dense<0.000000e+00> : vector<32x128xf32>
    %6 = tpu.matmul %4, %5, %cst {dimension_numbers = #tpu.dot_dimension_numbers<[1], [0], [0], [1], [0, 0, 1, 1], [], []>} : vector<32x32xf32>, vector<32x128xf32>, vector<32x128xf32> -> vector<32x128xf32>
    %7 = arith.addf %3, %6 : vector<32x128xf32>
    %c0_6 = arith.constant 0 : index
    %c0_7 = arith.constant 0 : index
    %8 = vector.load %arg6[%c0_6, %c0_7] : memref<32x128xf32, #tpu.memory_space<vmem>>, vector<32x128xf32>
    tpu.vector_store %arg6[%c0_6, %c0_7], %7 {strides = array<i32>} : memref<32x128xf32, #tpu.memory_space<vmem>>, vector<32x128xf32>,
    %c0_i32_8 = arith.constant 0 : i32
    %9 = arith.cmpi eq, %arg2, %c0_i32_8 : i32
    %10 = arith.extui %9 : i1 to i32
    %c0_i32_9 = arith.constant 0 : i32
    %11 = arith.cmpi ne, %10, %c0_i32_9 : i32
    scf.if %11 {
      %c0_10 = arith.constant 0 : index
      %c0_11 = arith.constant 0 : index
      %12 = vector.load %arg6[%c0_10, %c0_11] : memref<32x128xf32, #tpu.memory_space<vmem>>, vector<32x128xf32>
      %c0_12 = arith.constant 0 : index
      %c0_13 = arith.constant 0 : index
      %13 = vector.load %arg5[%c0_12, %c0_13] : memref<32x128xf32, #tpu.memory_space<vmem>>, vector<32x128xf32>
      tpu.vector_store %arg5[%c0_12, %c0_13], %12 {strides = array<i32>} : memref<32x128xf32, #tpu.memory_space<vmem>>, vector<32x128xf32>,
    } else {
    }
    return
  }
  func.func @transform_0(%arg0: i32, %arg1: i32, %arg2: i32) -> (i32, i32) {
    %c0_i32 = arith.constant 0 : i32
    return %arg0, %arg2 : i32, i32
  }
  func.func @transform_1(%arg0: i32, %arg1: i32, %arg2: i32) -> (i32, i32) {
    %c0_i32 = arith.constant 0 : i32
    return %arg2, %arg1 : i32, i32
  }
  func.func @transform_2(%arg0: i32, %arg1: i32, %arg2: i32) -> (i32, i32) {
    %c0_i32 = arith.constant 0 : i32
    return %arg0, %arg1 : i32, i32
  }
}

</mosaic_0001>

<llo_original>
// kernel: tpu_custom_call.1
$region0: #{tpu_custom_call.1}
  #allocation0 [shape = 'u32[]', space=smem, size = 0x4, offset = 0x4, fixed_abs, tag = 'smem constant byte address 0x4 - core index']
  #allocation1 [shape = 'u32[144,128]{1,0:T(1,128)}', space=vmem, size = 0x12000, scoped, tag = 'internal scratch']
  #allocation2 [shape = 'f32[32,128]{1,0:T(8,128)}', space=vmem, size = 0x4000, scoped, tag = 'scratch operand']
  %s0 = inlined_call_operand.hbm [shape: f32[32,32], index: 0, kind: input, shape index: {}]
  %s1 = inlined_call_operand.hbm [shape: f32[32,128], index: 1, kind: input, shape index: {}]
  %s2 = inlined_call_operand.hbm [shape: f32[32,128], index: 2, kind: output, shape index: {}]
  %s3 = sld [smem:[#allocation0]]
  $region34: #{tpu_custom_call.1} parent=0
    _
  %s5 = ssub.s32 1, %s3
  %s6 = scalar_select 0, %s5, %s3
  $region1: #{tpu_custom_call.1} parent=0
    #allocation3 [shape = 'u8[16384]{0}', space=vmem, size = 0x4000, scoped, tag = 'input window, operand 0, single buffered']
    #allocation4 [shape = 's32[1]{0}', space=sflag, size = 0x4, scoped, tag = 'scoped memory for tpu_custom_call.1']
    #allocation5 [shape = 's32[1]{0}', space=sflag, size = 0x4, scoped, tag = 'scoped memory for tpu_custom_call.1']
    #allocation6 [shape = 'u8[16384]{0}', space=vmem, size = 0x4000, scoped, tag = 'input window, operand 1, single buffered']
    #allocation7 [shape = 's32[1]{0}', space=sflag, size = 0x4, scoped, tag = 'scoped memory for tpu_custom_call.1']
    #allocation8 [shape = 'u8[16384]{0}', space=vmem, size = 0x4000, scoped, tag = 'output window, operand 0, single buffered']
    %7 = vsyncpa [#allocation4], 0
    %8 = vsyncpa [#allocation7], 0
    %9 = vsyncpa [#allocation5], 0
    // Predicated region
    $region2: #{tpu_custom_call.1} parent=1 // pred_check
      _
    $region3: #{tpu_custom_call.1} parent=1 // pred_check_branch
      %11 = sbr.rel (0) target = $region5
    $region4: #{tpu_custom_call.1} parent=1 // pred_region
      %s13 = ssub.s32 512, 512
      %14 = vsyncadd [#allocation4], %s13
      %s15 = sshll.u32 [#allocation3], 4
      %s16 = int_to_ptr.vmem [resolvable:$true] %s15
      %21 = dma.hbm_to_vmem [thread:$0]  %s0, 512, %s16, [#allocation4], 128, 128, 8
    $region5: #{tpu_custom_call.1} parent=1 // pred_fallthru
      _
    // Predicated region
    $region6: #{tpu_custom_call.1} parent=1 // pred_check
      _
    $region7: #{tpu_custom_call.1} parent=1 // pred_check_branch
      %23 = sbr.rel (0) target = $region9
    $region8: #{tpu_custom_call.1} parent=1 // pred_region
      %s25 = ssub.s32 512, 512
      %26 = vsyncadd [#allocation7], %s25
      %s27 = sshll.u32 [#allocation6], 4
      %s28 = int_to_ptr.vmem [resolvable:$true] %s27
      %33 = dma.hbm_to_vmem [thread:$0]  %s1, 512, %s28, [#allocation7], 128, 128, 8
    $region9: #{tpu_custom_call.1} parent=1 // pred_fallthru
      _
    // Predicated region
    $region10: #{tpu_custom_call.1} parent=1 // pred_check
      _
    $region11: #{tpu_custom_call.1} parent=1 // pred_check_branch
      %35 = sbr.rel (0) target = $region13
    $region12: #{tpu_custom_call.1} parent=1 // pred_region
      %36 = dma.done [#allocation4], 512
    $region13: #{tpu_custom_call.1} parent=1 // pred_fallthru
      _
    // Predicated region
    $region14: #{tpu_custom_call.1} parent=1 // pred_check
      _
    $region15: #{tpu_custom_call.1} parent=1 // pred_check_branch
      %38 = sbr.rel (0) target = $region17
    $region16: #{tpu_custom_call.1} parent=1 // pred_region
      %39 = dma.done [#allocation7], 512
    $region17: #{tpu_custom_call.1} parent=1 // pred_fallthru
      _
    %p40 = scmp.eq.s32.totalorder 0, 0
    // Predicated region
    $region18: #{tpu_custom_call.1} parent=1 // pred_check
      %p41 = pneg %p40
    $region19: #{tpu_custom_call.1} parent=1 // pred_check_branch
      %43 = sbr.rel (%p41) target = $region21
    $region20: #{tpu_custom_call.1} parent=1 // pred_region
      %44 = vst [vmem:[#allocation2] sm:$0xff] 0.0
      %45 = vst [vmem:[#allocation2 + $0x8] sm:$0xff] 0.0
      %46 = vst [vmem:[#allocation2 + $0x10] sm:$0xff] 0.0
      %47 = vst [vmem:[#allocation2 + $0x18] sm:$0xff] 0.0
    $region21: #{tpu_custom_call.1} parent=1 // pred_fallthru
      _
    %v48 = vld [vmem:[#allocation2] sm:$0xff]
    %v49 = vld [vmem:[#allocation2 + $0x8] sm:$0xff]
    %v50 = vld [vmem:[#allocation2 + $0x10] sm:$0xff]
    %v51 = vld [vmem:[#allocation2 + $0x18] sm:$0xff]
    %v52 = vld [vmem:[#allocation3] sm:$0xff]
    %v53 = vld [vmem:[#allocation3 + $0x8] sm:$0xff]
    %v54 = vld [vmem:[#allocation3 + $0x10] sm:$0xff]
    %v55 = vld [vmem:[#allocation3 + $0x18] sm:$0xff]
    %v56 = vld [vmem:[#allocation6] sm:$0xff]
    %v57 = vld [vmem:[#allocation6 + $0x8] sm:$0xff]
    %v58 = vld [vmem:[#allocation6 + $0x10] sm:$0xff]
    %v59 = vld [vmem:[#allocation6 + $0x18] sm:$0xff]
    %vm60 = vcmask 261120
    %v62 = vsel %vm60, %v52, 0
    %v65 = vsel %vm60, %v53, 0
    %v68 = vsel %vm60, %v54, 0
    %v71 = vsel %vm60, %v55, 0
    %73 = vmatprep.subr.mxu0 0.0
    %74 = vmatpush1.msra.mxu0 %v56
    %75 = vmatprep.subr.mxu0 0.0
    %76 = vmatpush1.msra.mxu0 %v57
    %77 = vmatprep.subr.mxu0 0.0
    %78 = vmatpush1.msra.mxu0 %v58
    %79 = vmatprep.subr.mxu0 0.0
    %80 = vmatpush1.msra.mxu0 %v59
    %81 = vmatprep.subr.mxu0 0.0
    %82 = vmatpush1.msra.mxu0 0.0
    %83 = vmatprep.subr.mxu0 0.0
    %84 = vmatpush1.msra.mxu0 0.0
    %85 = vmatprep.subr.mxu0 0.0
    %86 = vmatpush1.msra.mxu0 0.0
    %87 = vmatprep.subr.mxu0 0.0
    %88 = vmatpush1.msra.mxu0 0.0
    %89 = vmatprep.subr.mxu0 0.0
    %90 = vmatpush1.msra.mxu0 0.0
    %91 = vmatprep.subr.mxu0 0.0
    %92 = vmatpush1.msra.mxu0 0.0
    %93 = vmatprep.subr.mxu0 0.0
    %94 = vmatpush1.msra.mxu0 0.0
    %95 = vmatprep.subr.mxu0 0.0
    %96 = vmatpush1.msra.mxu0 0.0
    %97 = vmatprep.subr.mxu0 0.0
    %98 = vmatpush1.msra.mxu0 0.0
    %99 = vmatprep.subr.mxu0 0.0
    %100 = vmatpush1.msra.mxu0 0.0
    %101 = vmatprep.subr.mxu0 0.0
    %102 = vmatpush1.msra.mxu0 0.0
    %103 = vmatprep.subr.mxu0 0.0
    %104 = vmatpush1.msra.mxu0 0.0
    %105 = vmatprep.subr.mxu0 0.0
    %106 = vmatpush1.msra.mxu0 0.0
    %107 = vmatprep.subr.mxu0 0.0
    %108 = vmatpush1.msra.mxu0 0.0
    %109 = vmatprep.subr.mxu0 0.0
    %110 = vmatpush1.msra.mxu0 0.0
    %111 = vmatprep.subr.mxu0 0.0
    %112 = vmatpush1.msra.mxu0 0.0
    %113 = vmatprep.subr.mxu0 0.0
    %114 = vmatpush1.msra.mxu0 0.0
    %115 = vmatprep.subr.mxu0 0.0
    %116 = vmatpush1.msra.mxu0 0.0
    %117 = vmatprep.subr.mxu0 0.0
    %118 = vmatpush1.msra.mxu0 0.0
    %119 = vmatprep.subr.mxu0 0.0
    %120 = vmatpush1.msra.mxu0 0.0
    %121 = vmatprep.subr.mxu0 0.0
    %122 = vmatpush1.msra.mxu0 0.0
    %123 = vmatprep.subr.mxu0 0.0
    %124 = vmatpush1.msra.mxu0 0.0
    %125 = vmatprep.subr.mxu0 0.0
    %126 = vmatpush1.msra.mxu0 0.0
    %127 = vmatprep.subr.mxu0 0.0
    %128 = vmatpush1.msra.mxu0 0.0
    %129 = vmatprep.subr.mxu0 0.0
    %130 = vmatpush1.msra.mxu0 0.0
    %131 = vmatprep.subr.mxu0 0.0
    %132 = vmatpush1.msra.mxu0 0.0
    %133 = vmatprep.subr.mxu0 0.0
    %134 = vmatpush1.msra.mxu0 0.0
    %135 = vmatprep.subr.mxu0 0.0
    %136 = vmatpush1.msra.mxu0 0.0
    %137 = vmatprep.mubr.f32.mxu0 0.0
    %138 = vmatmul.mubr.f32.gmra.mrb[0].mxu0 %v62
    %v139 = vpop.f32.mrb[0].mxu0
    %v140 = vadd.f32 0.0, %v139
    %v141 = vpop.f32.mrb[0].mxu0
    %142 = vmatprep.mubr.f32.mxu0 0.0
    %143 = vmatmul.mubr.f32.gmra.mrb[0].mxu0 %v65
    %v144 = vpop.f32.mrb[0].mxu0
    %v145 = vadd.f32 0.0, %v144
    %v146 = vpop.f32.mrb[0].mxu0
    %147 = vmatprep.mubr.f32.mxu0 0.0
    %148 = vmatmul.mubr.f32.gmra.mrb[0].mxu0 %v68
    %v149 = vpop.f32.mrb[0].mxu0
    %v150 = vadd.f32 0.0, %v149
    %v151 = vpop.f32.mrb[0].mxu0
    %152 = vmatprep.mubr.f32.mxu0 0.0
    %153 = vmatmul.mubr.f32.gmra.mrb[0].mxu0 %v71
    %v154 = vpop.f32.mrb[0].mxu0
    %v155 = vadd.f32 0.0, %v154
    %v156 = vpop.f32.mrb[0].mxu0
    %157 = vdwg.mxu0
    %v158 = vadd.f32 %v48, %v140
    %v159 = vadd.f32 %v49, %v145
    %v160 = vadd.f32 %v50, %v150
    %v161 = vadd.f32 %v51, %v155
    %162 = vst [vmem:[#allocation2] sm:$0xff] %v158
    %163 = vst [vmem:[#allocation2 + $0x8] sm:$0xff] %v159
    %164 = vst [vmem:[#allocation2 + $0x10] sm:$0xff] %v160
    %165 = vst [vmem:[#allocation2 + $0x18] sm:$0xff] %v161
    // Predicated region
    $region22: #{tpu_custom_call.1} parent=1 // pred_check
      %p166 = pneg %p40
    $region23: #{tpu_custom_call.1} parent=1 // pred_check_branch
      %168 = sbr.rel (%p166) target = $region25
    $region24: #{tpu_custom_call.1} parent=1 // pred_region
      %v169 = vld [vmem:[#allocation2] sm:$0xff]
      %v170 = vld [vmem:[#allocation2 + $0x8] sm:$0xff]
      %v171 = vld [vmem:[#allocation2 + $0x10] sm:$0xff]
      %v172 = vld [vmem:[#allocation2 + $0x18] sm:$0xff]
      %173 = vst [vmem:[#allocation8] sm:$0xff] %v169
      %174 = vst [vmem:[#allocation8 + $0x8] sm:$0xff] %v170
      %175 = vst [vmem:[#allocation8 + $0x10] sm:$0xff] %v171
      %176 = vst [vmem:[#allocation8 + $0x18] sm:$0xff] %v172
    $region25: #{tpu_custom_call.1} parent=1 // pred_fallthru
      _
    // Predicated region
    $region26: #{tpu_custom_call.1} parent=1 // pred_check
      _
    $region27: #{tpu_custom_call.1} parent=1 // pred_check_branch
      %178 = sbr.rel (0) target = $region29
    $region28: #{tpu_custom_call.1} parent=1 // pred_region
      %s180 = ssub.s32 512, 512
      %181 = vsyncadd [#allocation5], %s180
      %s182 = sshll.u32 [#allocation8], 4
      %s183 = int_to_ptr.vmem [resolvable:$true] %s182
      %188 = dma.vmem_to_hbm [thread:$0]  %s183, 512, %s2, [#allocation5], 128, 128, 8
    $region29: #{tpu_custom_call.1} parent=1 // pred_fallthru
      _
    // Predicated region
    $region30: #{tpu_custom_call.1} parent=1 // pred_check
      _
    $region31: #{tpu_custom_call.1} parent=1 // pred_check_branch
      %190 = sbr.rel (0) target = $region33
    $region32: #{tpu_custom_call.1} parent=1 // pred_region
      %191 = dma.done [#allocation5], 512
    $region33: #{tpu_custom_call.1} parent=1 // pred_fallthru
      _
    %192 = vsyncpa [#allocation4], 1
    %193 = vsyncpa [#allocation7], 1
    %194 = vsyncpa [#allocation5], 1

</llo_original>
